<compile_context>
chip_gen: v7x
topology: tpu7x:2x2x1
jax: 0.10.0
libtpu: 0.0.40
codegen_flags: <defaults>
</compile_context>

<pallas_src>
import functools

import jax
import jax.numpy as jnp
from jax.experimental import pallas as pl
from jax.experimental.pallas import tpu as pltpu


def _cdiv(a, b):
    return -(-a // b)


def _poly1_focal_math(x, is_pos, epsilon, alpha, gamma):
    """Fused poly-1 focal loss math on an f32 tile (no division, 2 exp + 1 log1p)."""
    z = jnp.where(is_pos, x, -x)
    e = jnp.exp(-jnp.abs(z))
    log1p_e = jnp.log1p(e)
    ce = jnp.maximum(-z, 0.0) + log1p_e                    # stable BCE-with-logits
    # 1 - pt = sigmoid(-z) = exp(-(max(z,0)+log1p(e))): reuses log1p_e, no divide.
    one_m_pt = jnp.exp(-(jnp.maximum(z, 0.0) + log1p_e))

    if gamma == 2.0:
        pow_g = one_m_pt * one_m_pt
    elif gamma == 1.0:
        pow_g = one_m_pt
    elif gamma == 0.0:
        pow_g = jnp.ones_like(one_m_pt)
    else:
        pow_g = jnp.power(one_m_pt, gamma)

    fl = ce * pow_g
    if alpha >= 0.0:
        fl = jnp.where(is_pos, jnp.float32(alpha), jnp.float32(1.0 - alpha)) * fl

    if epsilon == 0.0:
        return fl
    tail = pow_g * one_m_pt                                # (1-pt)^(gamma+1)
    if epsilon == 1.0:
        return fl + tail
    return fl + jnp.float32(epsilon) * tail


def _poly1_focal_elem_kernel(t_ref, x_ref, o_ref, *, epsilon, alpha, gamma):
    """Per-element loss on one (1, C, t_s, 128) tile (reduction='none')."""
    x = x_ref[...].astype(jnp.float32)                     # native dtype -> f32 in VMEM
    tid = t_ref[...]                                       # (1, 1, t_s, 128) int32
    cls = jax.lax.broadcasted_iota(jnp.int32, x.shape, 1)  # class ids on dim 1
    is_pos = cls == tid
    loss = _poly1_focal_math(x, is_pos, epsilon, alpha, gamma)
    o_ref[...] = loss.astype(o_ref.dtype)


def _poly1_focal_sum_kernel(t_ref, x_ref, o_ref, *, epsilon, alpha, gamma,
                            hw, t_s, need_mask):
    """Per-block partial sum (reduction='mean'/'sum'): writes a (1,1,8,128) tile
    whose row 0 holds per-lane partial sums; finished with jnp.sum outside."""
    x = x_ref[...].astype(jnp.float32)
    tid = t_ref[...]
    cls = jax.lax.broadcasted_iota(jnp.int32, x.shape, 1)
    is_pos = cls == tid
    loss = _poly1_focal_math(x, is_pos, epsilon, alpha, gamma)

    if need_mask:
        # Mask spatial padding (hw -> multiple of 128) and grid-edge rows.
        s_iota = jax.lax.broadcasted_iota(jnp.int32, x.shape, 2)
        l_iota = jax.lax.broadcasted_iota(jnp.int32, x.shape, 3)
        flat = (pl.program_id(1) * t_s + s_iota) * 128 + l_iota
        loss = jnp.where(flat < hw, loss, 0.0)

    lane_sums = jnp.sum(loss, axis=(0, 1, 2), keepdims=True)        # (1,1,1,128)
    row = jax.lax.broadcasted_iota(jnp.int32, o_ref.shape, 2)       # (1,1,8,128)
    o_ref[...] = jnp.where(row == 0, lane_sums, 0.0).astype(o_ref.dtype)


def _pick_rows(S, row_bytes, sub_mult, budget_bytes, batch, min_steps=2):
    """Pick the sublane tile length t_s (rows of 128 lanes).

    Largest multiple of `sub_mult` whose double-buffered working set stays
    under `budget_bytes`; clamped to the full extent S (always legal); then
    shrunk if needed so the grid has >= `min_steps` steps (v7x megacore)."""
    if S <= sub_mult:
        return S
    max_rows = budget_bytes // (2 * row_bytes)             # 2x = double buffering
    t = max(sub_mult, (max_rows // sub_mult) * sub_mult)
    if t >= S:
        t = S
    while batch * _cdiv(S, t) < min_steps and t > sub_mult:
        t = max(sub_mult, ((t // 2) // sub_mult) * sub_mult)
    return t


def poly1_focal_loss(preds, target, *, num_classes, epsilon=1.0, alpha=0.25,
                     gamma=2.0, reduction="none", out_dtype=None,
                     vmem_budget_bytes=32 * 1024 * 1024):
    """JAX/Pallas equivalent of Poly1FocalLoss.forward for class-id targets.

    Implements label_is_onehot=False, weight=None, pos_weight=None.
    """
    # TODO(synk): weight / pos_weight rescaling and label_is_onehot=True inputs
    # are not implemented (defaults of the PyTorch module).
    shape = preds.shape
    N, C = shape[0], shape[1]
    assert C == num_classes
    hw = 1
    for s in shape[2:]:
        hw *= s
    out_dtype = preds.dtype if out_dtype is None else jnp.dtype(out_dtype)

    # Zero-copy views in the native NCHW layout and native dtype.
    x = preds.reshape(N, C, hw)
    t = target.reshape(N, 1, hw).astype(jnp.int32)

    padded_hw = _cdiv(hw, 128) * 128
    if padded_hw != hw:
        # Rare path (spatial size not a multiple of 128): one-time HBM pad copy.
        x = jnp.pad(x, ((0, 0), (0, 0), (0, padded_hw - hw)))
        t = jnp.pad(t, ((0, 0), (0, 0), (0, padded_hw - hw)))
    S = padded_hw // 128
    x4 = x.reshape(N, C, S, 128)
    t4 = t.reshape(N, 1, S, 128)

    x_isz = x4.dtype.itemsize
    o_isz = out_dtype.itemsize
    fused = reduction in ("mean", "sum")
    if fused:
        row_bytes = 128 * (C * x_isz + 4)                  # logits + int32 ids
        sub_mult = 8 * max(1, 4 // x_isz)
    else:
        row_bytes = 128 * (C * x_isz + C * o_isz + 4)      # + per-element output
        sub_mult = 8 * max(1, 4 // x_isz, 4 // o_isz)

    t_s = _pick_rows(S, row_bytes, sub_mult, vmem_budget_bytes, N)
    num_j = _cdiv(S, t_s)
    grid = (N, num_j)

    cparams = pltpu.CompilerParams(
        dimension_semantics=("parallel", "parallel"),
        vmem_limit_bytes=vmem_budget_bytes + (8 << 20))    # tiles + scratch headroom

    x_spec = pl.BlockSpec((1, C, t_s, 128), lambda n, j: (n, 0, j, 0))
    t_spec = pl.BlockSpec((1, 1, t_s, 128), lambda n, j: (n, 0, j, 0))

    if fused:
        kernel = functools.partial(
            _poly1_focal_sum_kernel, epsilon=float(epsilon), alpha=float(alpha),
            gamma=float(gamma), hw=hw, t_s=t_s,
            need_mask=(padded_hw != hw) or (S % t_s != 0))
        partials = pl.pallas_call(
            kernel,
            out_shape=jax.ShapeDtypeStruct((N, num_j, 8, 128), jnp.float32),
            grid=grid,
            in_specs=[t_spec, x_spec],
            out_specs=pl.BlockSpec((1, 1, 8, 128), lambda n, j: (n, j, 0, 0)),
            compiler_params=cparams,
        )(t4, x4)
        total = jnp.sum(partials)
        if reduction == "mean":
            total = total / jnp.float32(N * C * hw)
        return total.astype(out_dtype)

    kernel = functools.partial(
        _poly1_focal_elem_kernel, epsilon=float(epsilon), alpha=float(alpha),
        gamma=float(gamma))
    out4 = pl.pallas_call(
        kernel,
        out_shape=jax.ShapeDtypeStruct((N, C, S, 128), out_dtype),
        grid=grid,
        in_specs=[t_spec, x_spec],
        out_specs=pl.BlockSpec((1, C, t_s, 128), lambda n, j: (n, 0, j, 0)),
        compiler_params=cparams,
    )(t4, x4)

    out = out4.reshape(N, C, padded_hw)
    if padded_hw != hw:
        out = out[:, :, :hw]
    return out.reshape(shape)


def _reference(preds_nchw, target_ids, *, num_classes, epsilon, alpha, gamma):
    """Pure-JAX reference mirroring the PyTorch forward (reduction='none')."""
    x = preds_nchw.astype(jnp.float32)
    p = jax.nn.sigmoid(x)
    onehot = jax.nn.one_hot(target_ids, num_classes, dtype=jnp.float32)  # [N,H,W,C]
    tgt = jnp.transpose(onehot, (0, 3, 1, 2))                            # [N,C,H,W]
    ce = jnp.maximum(x, 0.0) - x * tgt + jnp.log1p(jnp.exp(-jnp.abs(x)))
    pt = tgt * p + (1.0 - tgt) * (1.0 - p)
    fl = ce * (1.0 - pt) ** gamma
    if alpha >= 0.0:
        fl = (alpha * tgt + (1.0 - alpha) * (1.0 - tgt)) * fl
    return fl + epsilon * (1.0 - pt) ** (gamma + 1.0)


if __name__ == "__main__":
    num_classes = 4
    N, H, W = 2, 16, 16

    key = jax.random.PRNGKey(0)
    k_preds, k_tgt = jax.random.split(key)
    preds = jax.random.normal(k_preds, (N, num_classes, H, W), dtype=jnp.float32)
    target = jax.random.randint(k_tgt, (N, H, W), 0, num_classes, dtype=jnp.int32)

    ref = _reference(preds, target, num_classes=num_classes,
                     epsilon=1.0, alpha=0.25, gamma=2.0)

    # reduction='none' (per-element loss), f32 logits.
    loss = poly1_focal_loss(preds, target, num_classes=num_classes,
                            epsilon=1.0, alpha=0.25, gamma=2.0, reduction="none")
    loss = jax.block_until_ready(loss)
    assert loss.shape == (N, num_classes, H, W)
    assert loss.dtype == preds.dtype
    assert jnp.allclose(loss, ref, atol=1e-5, rtol=1e-5)

    # Fused reduction path: partial sums in-kernel, no full loss tensor in HBM.
    loss_mean = jax.block_until_ready(
        poly1_focal_loss(preds, target, num_classes=num_classes,
                         epsilon=1.0, alpha=0.25, gamma=2.0, reduction="mean"))
    assert jnp.allclose(loss_mean.astype(jnp.float32), ref.mean(),
                        atol=1e-5, rtol=1e-5)

    # Native bf16 logits stream straight into the kernel (no wrapper upcast).
    preds_bf16 = preds.astype(jnp.bfloat16)
    loss_bf16 = jax.block_until_ready(
        poly1_focal_loss(preds_bf16, target, num_classes=num_classes,
                         epsilon=1.0, alpha=0.25, gamma=2.0, reduction="none"))
    ref_bf16 = _reference(preds_bf16.astype(jnp.float32), target,
                          num_classes=num_classes, epsilon=1.0, alpha=0.25, gamma=2.0)
    assert loss_bf16.dtype == jnp.bfloat16
    assert jnp.allclose(loss_bf16.astype(jnp.float32), ref_bf16,
                        atol=2e-2, rtol=2e-2)

    print("KERNEL_OK")
</pallas_src>

<mosaic_0001>
module attributes {stable_mosaic.version = 11 : i64} {
  func.func @_poly1_focal_elem_kernel(%arg0: i32, %arg1: i32, %arg2: memref<1x1x2x128xi32, #tpu.memory_space<vmem>>, %arg3: memref<1x4x2x128xf32, #tpu.memory_space<vmem>>, %arg4: memref<1x4x2x128xf32, #tpu.memory_space<vmem>>) attributes {dimension_semantics = [#tpu.dimension_semantics<parallel>, #tpu.dimension_semantics<parallel>], iteration_bounds = array<i64: 2, 1>, scalar_prefetch = 0 : i64, scratch_operands = 0 : i64, tpu.core_type = #tpu.core_type<tc>, window_params = [{transform_indices = @transform_0, window_bounds = array<i64: 1, 1, 2, 128>}, {transform_indices = @transform_1, window_bounds = array<i64: 1, 4, 2, 128>}, {transform_indices = @transform_2, window_bounds = array<i64: 1, 4, 2, 128>}]} {
    %c0 = arith.constant 0 : index
    %c0_0 = arith.constant 0 : index
    %c0_1 = arith.constant 0 : index
    %c0_2 = arith.constant 0 : index
    %0 = vector.load %arg3[%c0, %c0_0, %c0_1, %c0_2] : memref<1x4x2x128xf32, #tpu.memory_space<vmem>>, vector<1x4x2x128xf32>
    %c0_3 = arith.constant 0 : index
    %c0_4 = arith.constant 0 : index
    %c0_5 = arith.constant 0 : index
    %c0_6 = arith.constant 0 : index
    %1 = vector.load %arg2[%c0_3, %c0_4, %c0_5, %c0_6] : memref<1x1x2x128xi32, #tpu.memory_space<vmem>>, vector<1x1x2x128xi32>
    %2 = tpu.iota {dimensions = array<i32: 1>} : vector<1x4x2x128xi32>
    %3 = vector.broadcast %1 : vector<1x1x2x128xi32> to vector<1x4x2x128xi32>
    %4 = arith.cmpi eq, %2, %3 : vector<1x4x2x128xi32>
    %cst = arith.constant 0.000000e+00 : f32
    %5 = vector.broadcast %cst : f32 to vector<1x4x2x128xf32>
    %6 = arith.subf %5, %0 : vector<1x4x2x128xf32>
    %7 = arith.select %4, %0, %6 : vector<1x4x2x128xi1>, vector<1x4x2x128xf32>
    %8 = math.absf %7 : vector<1x4x2x128xf32>
    %cst_7 = arith.constant 0.000000e+00 : f32
    %9 = vector.broadcast %cst_7 : f32 to vector<1x4x2x128xf32>
    %10 = arith.subf %9, %8 : vector<1x4x2x128xf32>
    %11 = math.exp %10 : vector<1x4x2x128xf32>
    %12 = math.log1p %11 : vector<1x4x2x128xf32>
    %cst_8 = arith.constant 0.000000e+00 : f32
    %13 = vector.broadcast %cst_8 : f32 to vector<1x4x2x128xf32>
    %14 = arith.subf %13, %7 : vector<1x4x2x128xf32>
    %cst_9 = arith.constant 0.000000e+00 : f32
    %15 = vector.broadcast %cst_9 : f32 to vector<1x4x2x128xf32>
    %16 = arith.maximumf %14, %15 : vector<1x4x2x128xf32>
    %17 = arith.addf %16, %12 : vector<1x4x2x128xf32>
    %cst_10 = arith.constant 0.000000e+00 : f32
    %18 = vector.broadcast %cst_10 : f32 to vector<1x4x2x128xf32>
    %19 = arith.maximumf %7, %18 : vector<1x4x2x128xf32>
    %20 = arith.addf %19, %12 : vector<1x4x2x128xf32>
    %cst_11 = arith.constant 0.000000e+00 : f32
    %21 = vector.broadcast %cst_11 : f32 to vector<1x4x2x128xf32>
    %22 = arith.subf %21, %20 : vector<1x4x2x128xf32>
    %23 = math.exp %22 : vector<1x4x2x128xf32>
    %24 = arith.mulf %23, %23 : vector<1x4x2x128xf32>
    %25 = arith.mulf %17, %24 : vector<1x4x2x128xf32>
    %cst_12 = arith.constant 2.500000e-01 : f32
    %cst_13 = arith.constant 7.500000e-01 : f32
    %26 = vector.broadcast %cst_12 : f32 to vector<1x4x2x128xf32>
    %27 = vector.broadcast %cst_13 : f32 to vector<1x4x2x128xf32>
    %28 = arith.select %4, %26, %27 : vector<1x4x2x128xi1>, vector<1x4x2x128xf32>
    %29 = arith.mulf %28, %25 : vector<1x4x2x128xf32>
    %30 = arith.mulf %24, %23 : vector<1x4x2x128xf32>
    %31 = arith.addf %29, %30 : vector<1x4x2x128xf32>
    %c0_14 = arith.constant 0 : index
    %c0_15 = arith.constant 0 : index
    %c0_16 = arith.constant 0 : index
    %c0_17 = arith.constant 0 : index
    %32 = vector.load %arg4[%c0_14, %c0_15, %c0_16, %c0_17] : memref<1x4x2x128xf32, #tpu.memory_space<vmem>>, vector<1x4x2x128xf32>
    tpu.vector_store %arg4[%c0_14, %c0_15, %c0_16, %c0_17], %31 {strides = array<i32>} : memref<1x4x2x128xf32, #tpu.memory_space<vmem>>, vector<1x4x2x128xf32>,
    return
  }
  func.func @transform_0(%arg0: i32, %arg1: i32) -> (i32, i32, i32, i32) {
    %c0_i32 = arith.constant 0 : i32
    %c0_i32_0 = arith.constant 0 : i32
    %c0_i32_1 = arith.constant 0 : i32
    return %arg0, %c0_i32, %arg1, %c0_i32_0 : i32, i32, i32, i32
  }
  func.func @transform_1(%arg0: i32, %arg1: i32) -> (i32, i32, i32, i32) {
    %c0_i32 = arith.constant 0 : i32
    %c0_i32_0 = arith.constant 0 : i32
    %c0_i32_1 = arith.constant 0 : i32
    return %arg0, %c0_i32, %arg1, %c0_i32_0 : i32, i32, i32, i32
  }
  func.func @transform_2(%arg0: i32, %arg1: i32) -> (i32, i32, i32, i32) {
    %c0_i32 = arith.constant 0 : i32
    %c0_i32_0 = arith.constant 0 : i32
    %c0_i32_1 = arith.constant 0 : i32
    return %arg0, %c0_i32, %arg1, %c0_i32_0 : i32, i32, i32, i32
  }
}

</mosaic_0001>

<llo_original>
// kernel: tpu_custom_call.1
$region0: #{tpu_custom_call.1}
  #allocation0 [shape = 'u32[]', space=smem, size = 0x4, offset = 0x4, fixed_abs, tag = 'smem constant byte address 0x4 - core index']
  #allocation1 [shape = 'u32[144,128]{1,0:T(1,128)}', space=vmem, size = 0x12000, scoped, tag = 'internal scratch']
  %s0 = inlined_call_operand.hbm [shape: s32[2,1,2,128], index: 0, kind: input, shape index: {}]
  %s1 = inlined_call_operand.hbm [shape: f32[2,4,2,128], index: 1, kind: input, shape index: {}]
  %s2 = inlined_call_operand.hbm [shape: f32[2,4,2,128], index: 2, kind: output, shape index: {}]
  %s3 = sld [smem:[#allocation0]]
  $region49: #{tpu_custom_call.1} parent=0
    _
  %s5 = ssub.s32 1, %s3
  %s6 = scalar_select 0, %s5, %s3
  $region1: #{tpu_custom_call.1} parent=0
    #allocation2 [shape = 'u8[2048]{0}', space=vmem, size = 0x800, scoped, tag = 'input window, operand 0']
    #allocation3 [shape = 's32[2]{0}', space=sflag, size = 0x8, scoped, tag = 'scoped memory for tpu_custom_call.1']
    #allocation4 [shape = 's32[2]{0}', space=sflag, size = 0x8, scoped, tag = 'scoped memory for tpu_custom_call.1']
    #allocation5 [shape = 'u8[8192]{0}', space=vmem, size = 0x2000, scoped, tag = 'input window, operand 1']
    #allocation6 [shape = 's32[2]{0}', space=sflag, size = 0x8, scoped, tag = 'scoped memory for tpu_custom_call.1']
    #allocation7 [shape = 'u8[8192]{0}', space=vmem, size = 0x2000, scoped, tag = 'output window, operand 0']
    %7 = vsyncpa [#allocation3], 0
    %s8 = scalar_lea.sflag [#allocation3], 1
    %9 = vsyncpa %s8, 0
    %10 = vsyncpa [#allocation6], 0
    %s11 = scalar_lea.sflag [#allocation6], 1
    %12 = vsyncpa %s11, 0
    %13 = vsyncpa [#allocation4], 0
    %s14 = scalar_lea.sflag [#allocation4], 1
    %15 = vsyncpa %s14, 0
    loop: start=0, step=1, limit=4
    $region2: #{tpu_custom_call.1} parent=1 // loop_pre_header
      _
    $region3: #{tpu_custom_call.1} parent=1 // loop_header
      %s17 = sphi 0, %s21
      %p18 = scmp.ge.s32.totalorder %s17, 4
      %s24 = sphi 0, %s36
      %s25 = sphi 0, %s32
      %s26 = sphi 0, %s24
      %s27 = sphi 0, %s25
      %s28 = sphi 0, %s26
      %s29 = sphi 0, %s27
      %s41 = sphi 0, %s43
      %s44 = sphi 0, %s41
      %s45 = sphi 0, %s44
      %s61 = sphi 0, %s45
      %s69 = sphi 0, %s71
      %s72 = sphi 0, %s69
      %s73 = sphi 0, %s72
      %s89 = sphi 0, %s73
      %s97 = sphi 0, %s99
      %s100 = sphi 0, %s97
      %s101 = sphi 0, %s100
      %s117 = sphi 0, %s101
    $region4: #{tpu_custom_call.1} parent=1 // loop_header_branch
      %20 = sbr.rel (%p18) target = $region8
    $region5: #{tpu_custom_call.1} parent=1 // loop_body
      %s22 = ssub.s32 %s17, 1
      %s23 = ssub.s32 %s17, 2
      %s30 = sadd.s32 1, %s25
      %p31 = scmp.ge.s32.totalorder %s30, 1
      %s32 = scalar_select %p31, 0, %s30
      %s33 = sadd.s32 1, %s24
      %s34 = scalar_select %p31, %s33, %s24
      %p35 = scmp.ge.s32.totalorder %s34, 2
      %s36 = scalar_select %p35, 0, %s34
      %s37 = ssub.s32 %s24, %s36
      %s38 = ssub.s32 %s25, %s32
      %s39 = sor.u32 %s37, %s38
      %p40 = scmp.eq.s32.totalorder %s39, 0
      %s42 = sadd.s32 %s41, 1
      %s43 = scalar_select %p40, %s41, %s42
      %p46 = pneg %p40
      %p47 = scmp.eq.s32.totalorder %s17, 1
      %p48 = por %p46, %p47
      %p49 = scmp.ne.s32.totalorder %s41, %s44
      %p50 = scmp.eq.s32.totalorder %s17, 0
      %p51 = por %p49, %p50
      %p52 = scmp.ne.s32.totalorder %s41, %s44
      %p53 = scmp.eq.s32.totalorder %s22, 1
      %p54 = por %p52, %p53
      %p55 = scmp.ne.s32.totalorder %s44, %s45
      %p56 = scmp.eq.s32.totalorder %s22, 0
      %p57 = por %p55, %p56
      %p58 = scmp.ne.s32.totalorder %s44, %s45
      %p59 = scmp.eq.s32.totalorder %s23, 1
      %p60 = por %p58, %p59
      %p62 = scmp.ne.s32.totalorder %s45, %s61
      %p63 = scmp.eq.s32.totalorder %s23, 0
      %p64 = por %p62, %p63
      %s65 = ssub.s32 %s24, %s36
      %s66 = ssub.s32 %s25, %s32
      %s67 = sor.u32 %s65, %s66
      %p68 = scmp.eq.s32.totalorder %s67, 0
      %s70 = sadd.s32 %s69, 1
      %s71 = scalar_select %p68, %s69, %s70
      %p74 = pneg %p68
      %p75 = scmp.eq.s32.totalorder %s17, 1
      %p76 = por %p74, %p75
      %p77 = scmp.ne.s32.totalorder %s69, %s72
      %p78 = scmp.eq.s32.totalorder %s17, 0
      %p79 = por %p77, %p78
      %p80 = scmp.ne.s32.totalorder %s69, %s72
      %p81 = scmp.eq.s32.totalorder %s22, 1
      %p82 = por %p80, %p81
      %p83 = scmp.ne.s32.totalorder %s72, %s73
      %p84 = scmp.eq.s32.totalorder %s22, 0
      %p85 = por %p83, %p84
      %p86 = scmp.ne.s32.totalorder %s72, %s73
      %p87 = scmp.eq.s32.totalorder %s23, 1
      %p88 = por %p86, %p87
      %p90 = scmp.ne.s32.totalorder %s73, %s89
      %p91 = scmp.eq.s32.totalorder %s23, 0
      %p92 = por %p90, %p91
      %s93 = ssub.s32 %s24, %s36
      %s94 = ssub.s32 %s25, %s32
      %s95 = sor.u32 %s93, %s94
      %p96 = scmp.eq.s32.totalorder %s95, 0
      %s98 = sadd.s32 %s97, 1
      %s99 = scalar_select %p96, %s97, %s98
      %p102 = pneg %p96
      %p103 = scmp.eq.s32.totalorder %s17, 1
      %p104 = por %p102, %p103
      %p105 = scmp.ne.s32.totalorder %s97, %s100
      %p106 = scmp.eq.s32.totalorder %s17, 0
      %p107 = por %p105, %p106
      %p108 = scmp.ne.s32.totalorder %s97, %s100
      %p109 = scmp.eq.s32.totalorder %s22, 1
      %p110 = por %p108, %p109
      %p111 = scmp.ne.s32.totalorder %s100, %s101
      %p112 = scmp.eq.s32.totalorder %s22, 0
      %p113 = por %p111, %p112
      %p114 = scmp.ne.s32.totalorder %s100, %s101
      %p115 = scmp.eq.s32.totalorder %s23, 1
      %p116 = por %p114, %p115
      %p118 = scmp.ne.s32.totalorder %s101, %s117
      %p119 = scmp.eq.s32.totalorder %s23, 0
      %p120 = por %p118, %p119
      %p121 = scmp.le.s32.totalorder 1, %s17
      %p122 = scmp.lt.s32.totalorder %s17, 3
      %p123 = pnand %p121, %p122
      %p124 = pneg %p123
      // Predicated region
      $region9: #{tpu_custom_call.1} parent=5 // pred_check
        _
      $region10: #{tpu_custom_call.1} parent=5 // pred_check_branch
        %126 = sbr.rel (%p123) target = $region12
      $region11: #{tpu_custom_call.1} parent=5 // pred_region
        %s127 = ssub.s32 %s17, 1
      $region12: #{tpu_custom_call.1} parent=5 // pred_fallthru
        _
      %p128 = scmp.lt.s32.totalorder %s17, 2
      // Predicated region
      $region13: #{tpu_custom_call.1} parent=5 // pred_check
        %p129 = pneg %p128
      $region14: #{tpu_custom_call.1} parent=5 // pred_check_branch
        %131 = sbr.rel (%p129) target = $region16
      $region15: #{tpu_custom_call.1} parent=5 // pred_region
        // Predicated region
        $region17: #{tpu_custom_call.1} parent=15 // pred_check
          %p132 = pneg %p51
        $region18: #{tpu_custom_call.1} parent=15 // pred_check_branch
          %134 = sbr.rel (%p132) target = $region20
        $region19: #{tpu_custom_call.1} parent=15 // pred_region
          %s135 = sand.u32 %s41, 1
          %s136 = scalar_lea.sflag [#allocation3], %s135
          %s137 = sand.u32 %s41, 1
          %s138 = smul.addr %s137, 2
          %s139 = scalar_lea.vmem [#allocation2], %s138
          %s141 = ssub.s32 32, 32
          %142 = vsyncadd %s136, %s141
          %s143 = sadd.s32 %s25, %s24
          %s144 = smul.addr %s143, 32
          %s145 = scalar_lea.hbm %s0, %s144
          %s147 = sshll.u32 %s139, 4
          %s148 = int_to_ptr.vmem [resolvable:$true] %s147
          %150 = dma.hbm_to_vmem [thread:$0]  %s145, 32, %s148, %s136
        $region20: #{tpu_custom_call.1} parent=15 // pred_fallthru
          _
        // Predicated region
        $region21: #{tpu_custom_call.1} parent=15 // pred_check
          %p151 = pneg %p79
        $region22: #{tpu_custom_call.1} parent=15 // pred_check_branch
          %153 = sbr.rel (%p151) target = $region24
        $region23: #{tpu_custom_call.1} parent=15 // pred_region
          %s154 = sand.u32 %s69, 1
          %s155 = scalar_lea.sflag [#allocation6], %s154
          %s156 = sand.u32 %s69, 1
          %s157 = smul.addr %s156, 8
          %s158 = scalar_lea.vmem [#allocation5], %s157
          %s160 = ssub.s32 128, 128
          %161 = vsyncadd %s155, %s160
          %s162 = smul.addr %s24, 4
          %s163 = sadd.s32 %s25, %s162
          %s164 = smul.addr %s163, 32
          %s165 = scalar_lea.hbm %s1, %s164
          %s166 = sshll.u32 %s158, 4
          %s167 = int_to_ptr.vmem [resolvable:$true] %s166
          %172 = dma.hbm_to_vmem [thread:$0]  %s165, 128, %s167, %s155, 32, 32, 2
        $region24: #{tpu_custom_call.1} parent=15 // pred_fallthru
          _
      $region16: #{tpu_custom_call.1} parent=5 // pred_fallthru
        _
      %p173 = scmp.le.s32.totalorder 1, %s17
      %p174 = scmp.lt.s32.totalorder %s17, 3
      %p175 = pnand %p173, %p174
      %p176 = pneg %p175
      // Predicated region
      $region25: #{tpu_custom_call.1} parent=5 // pred_check
        _
      $region26: #{tpu_custom_call.1} parent=5 // pred_check_branch
        %178 = sbr.rel (%p175) target = $region28
      $region27: #{tpu_custom_call.1} parent=5 // pred_region
        %s179 = ssub.s32 %s17, 1
        %s180 = sand.u32 %s44, 1
        %s181 = scalar_lea.sflag [#allocation3], %s180
        %s182 = sand.u32 %s44, 1
        %s183 = smul.addr %s182, 2
        %s184 = scalar_lea.vmem [#allocation2], %s183
        // Predicated region
        $region29: #{tpu_custom_call.1} parent=27 // pred_check
          %p185 = pneg %p57
        $region30: #{tpu_custom_call.1} parent=27 // pred_check_branch
          %187 = sbr.rel (%p185) target = $region32
        $region31: #{tpu_custom_call.1} parent=27 // pred_region
          %188 = dma.done %s181, 32
        $region32: #{tpu_custom_call.1} parent=27 // pred_fallthru
          _
        %s189 = sand.u32 %s72, 1
        %s190 = scalar_lea.sflag [#allocation6], %s189
        %s191 = sand.u32 %s72, 1
        %s192 = smul.addr %s191, 8
        %s193 = scalar_lea.vmem [#allocation5], %s192
        // Predicated region
        $region33: #{tpu_custom_call.1} parent=27 // pred_check
          %p194 = pneg %p85
        $region34: #{tpu_custom_call.1} parent=27 // pred_check_branch
          %196 = sbr.rel (%p194) target = $region36
        $region35: #{tpu_custom_call.1} parent=27 // pred_region
          %197 = dma.done %s190, 128
        $region36: #{tpu_custom_call.1} parent=27 // pred_fallthru
          _
        %s198 = sand.u32 %s44, 1
        %s199 = scalar_lea.sflag [#allocation3], %s198
        %s200 = sand.u32 %s44, 1
        %s201 = smul.addr %s200, 2
        %s202 = scalar_lea.vmem [#allocation2], %s201
        %p203 = pneg %p57
        %p204 = pneg %p54
        %s205 = sand.u32 %s72, 1
        %s206 = scalar_lea.sflag [#allocation6], %s205
        %s207 = sand.u32 %s72, 1
        %s208 = smul.addr %s207, 8
        %s209 = scalar_lea.vmem [#allocation5], %s208
        %p210 = pneg %p85
        %p211 = pneg %p82
        %p212 = pneg %p113
        %p213 = pneg %p110
        %s214 = sand.u32 %s100, 1
        %s215 = scalar_lea.sflag [#allocation4], %s214
        %s216 = sand.u32 %s100, 1
        %s217 = smul.addr %s216, 8
        %s218 = scalar_lea.vmem [#allocation7], %s217
        %v219 = vld [vmem:[%s193] sm:$0x3]
        %v220 = vld [vmem:[%s193 + $0x2] sm:$0x3]
        %v221 = vld [vmem:[%s193 + $0x4] sm:$0x3]
        %v222 = vld [vmem:[%s193 + $0x6] sm:$0x3]
        %v223 = vld [vmem:[%s184] sm:$0x3]
        %vm224 = vcmp.eq.s32.totalorder %v223, 0
        %vm225 = vcmp.eq.s32.totalorder %v223, 1
        %vm226 = vcmp.eq.s32.totalorder %v223, 2
        %vm227 = vcmp.eq.s32.totalorder %v223, 3
        %v228 = vsub.f32 0.0, %v219
        %v229 = vsub.f32 0.0, %v220
        %v230 = vsub.f32 0.0, %v221
        %v231 = vsub.f32 0.0, %v222
        %v232 = vsel %vm224, %v219, %v228
        %v233 = vsel %vm225, %v220, %v229
        %v234 = vsel %vm226, %v221, %v230
        %v235 = vsel %vm227, %v222, %v231
        %v236 = vand.u32 2147483647, %v232
        %v237 = vand.u32 2147483647, %v233
        %v238 = vand.u32 2147483647, %v234
        %v239 = vand.u32 2147483647, %v235
        %v240 = vsub.f32 0.0, %v236
        %v241 = vsub.f32 0.0, %v237
        %v242 = vsub.f32 0.0, %v238
        %v243 = vsub.f32 0.0, %v239
        %v244 = vmul.f32 %v240, 1.442695
        %v245 = vpow.pop %v244
        %v246 = vmul.f32 %v241, 1.442695
        %v247 = vpow.pop %v246
        %v248 = vmul.f32 %v242, 1.442695
        %v249 = vpow.pop %v248
        %v250 = vmul.f32 %v243, 1.442695
        %v251 = vpow.pop %v250
        %v252 = vadd.f32 %v245, 1.0
        %v253 = vlog2.pop %v252
        %v254 = vmul.f32 %v253, 0.6931472
        %v255 = vmul.f32 -0.5, %v245
        %v256 = vadd.f32 %v255, 1.0
        %v257 = vmul.f32 %v256, %v245
        %v258 = vand.u32 2147483647, %v245
        %vm259 = vcmp.lt.f32.partialorder %v258, 0.0004427343
        %v260 = vsel %vm259, %v257, %v254
        %v261 = vadd.f32 %v247, 1.0
        %v262 = vlog2.pop %v261
        %v263 = vmul.f32 %v262, 0.6931472
        %v264 = vmul.f32 -0.5, %v247
        %v265 = vadd.f32 %v264, 1.0
        %v266 = vmul.f32 %v265, %v247
        %v267 = vand.u32 2147483647, %v247
        %vm268 = vcmp.lt.f32.partialorder %v267, 0.0004427343
        %v269 = vsel %vm268, %v266, %v263
        %v270 = vadd.f32 %v249, 1.0
        %v271 = vlog2.pop %v270
        %v272 = vmul.f32 %v271, 0.6931472
        %v273 = vmul.f32 -0.5, %v249
        %v274 = vadd.f32 %v273, 1.0
        %v275 = vmul.f32 %v274, %v249
        %v276 = vand.u32 2147483647, %v249
        %vm277 = vcmp.lt.f32.partialorder %v276, 0.0004427343
        %v278 = vsel %vm277, %v275, %v272
        %v279 = vadd.f32 %v251, 1.0
        %v280 = vlog2.pop %v279
        %v281 = vmul.f32 %v280, 0.6931472
        %v282 = vmul.f32 -0.5, %v251
        %v283 = vadd.f32 %v282, 1.0
        %v284 = vmul.f32 %v283, %v251
        %v285 = vand.u32 2147483647, %v251
        %vm286 = vcmp.lt.f32.partialorder %v285, 0.0004427343
        %v287 = vsel %vm286, %v284, %v281
        %v288 = vsub.f32 0.0, %v232
        %v289 = vsub.f32 0.0, %v233
        %v290 = vsub.f32 0.0, %v234
        %v291 = vsub.f32 0.0, %v235
        %v292 = vmax.f32 %v288, 0.0
        %v293 = vmax.f32 %v289, 0.0
        %v294 = vmax.f32 %v290, 0.0
        %v295 = vmax.f32 %v291, 0.0
        %v296 = vadd.f32 %v292, %v260
        %v297 = vadd.f32 %v293, %v269
        %v298 = vadd.f32 %v294, %v278
        %v299 = vadd.f32 %v295, %v287
        %v300 = vmax.f32 %v232, 0.0
        %v301 = vmax.f32 %v233, 0.0
        %v302 = vmax.f32 %v234, 0.0
        %v303 = vmax.f32 %v235, 0.0
        %v304 = vadd.f32 %v300, %v260
        %v305 = vadd.f32 %v301, %v269
        %v306 = vadd.f32 %v302, %v278
        %v307 = vadd.f32 %v303, %v287
        %v308 = vsub.f32 0.0, %v304
        %v309 = vsub.f32 0.0, %v305
        %v310 = vsub.f32 0.0, %v306
        %v311 = vsub.f32 0.0, %v307
        %v312 = vmul.f32 %v308, 1.442695
        %v313 = vpow.pop %v312
        %v314 = vmul.f32 %v309, 1.442695
        %v315 = vpow.pop %v314
        %v316 = vmul.f32 %v310, 1.442695
        %v317 = vpow.pop %v316
        %v318 = vmul.f32 %v311, 1.442695
        %v319 = vpow.pop %v318
        %v320 = vmul.f32 %v313, %v313
        %v321 = vmul.f32 %v315, %v315
        %v322 = vmul.f32 %v317, %v317
        %v323 = vmul.f32 %v319, %v319
        %v324 = vmul.f32 %v296, %v320
        %v325 = vmul.f32 %v297, %v321
        %v326 = vmul.f32 %v298, %v322
        %v327 = vmul.f32 %v299, %v323
        %v328 = vsel %vm224, 0.25, 0.75
        %v329 = vsel %vm225, 0.25, 0.75
        %v330 = vsel %vm226, 0.25, 0.75
        %v331 = vsel %vm227, 0.25, 0.75
        %v332 = vmul.f32 %v328, %v324
        %v333 = vmul.f32 %v329, %v325
        %v334 = vmul.f32 %v330, %v326
        %v335 = vmul.f32 %v331, %v327
        %v336 = vmul.f32 %v320, %v313
        %v337 = vmul.f32 %v321, %v315
        %v338 = vmul.f32 %v322, %v317
        %v339 = vmul.f32 %v323, %v319
        %v340 = vadd.f32 %v332, %v336
        %v341 = vadd.f32 %v333, %v337
        %v342 = vadd.f32 %v334, %v338
        %v343 = vadd.f32 %v335, %v339
        %344 = vst [vmem:[%s218] sm:$0x3] %v340
        %345 = vst [vmem:[%s218 + $0x2] sm:$0x3] %v341
        %346 = vst [vmem:[%s218 + $0x4] sm:$0x3] %v342
        %347 = vst [vmem:[%s218 + $0x6] sm:$0x3] %v343
        %s348 = sand.u32 %s100, 1
        %s349 = scalar_lea.sflag [#allocation4], %s348
        %s350 = sand.u32 %s100, 1
        %s351 = smul.addr %s350, 8
        %s352 = scalar_lea.vmem [#allocation7], %s351
        // Predicated region
        $region37: #{tpu_custom_call.1} parent=27 // pred_check
          %p353 = pneg %p110
        $region38: #{tpu_custom_call.1} parent=27 // pred_check_branch
          %355 = sbr.rel (%p353) target = $region40
        $region39: #{tpu_custom_call.1} parent=27 // pred_region
          %s357 = ssub.s32 128, 128
          %358 = vsyncadd %s349, %s357
          %s359 = smul.addr %s26, 4
          %s360 = sadd.s32 %s27, %s359
          %s361 = smul.addr %s360, 32
          %s362 = scalar_lea.hbm %s2, %s361
          %s363 = sshll.u32 %s352, 4
          %s364 = int_to_ptr.vmem [resolvable:$true] %s363
          %369 = dma.vmem_to_hbm [thread:$0]  %s364, 128, %s362, %s349, 32, 32, 2
        $region40: #{tpu_custom_call.1} parent=27 // pred_fallthru
          _
      $region28: #{tpu_custom_call.1} parent=5 // pred_fallthru
        _
      %p370 = scmp.le.s32.totalorder 2, %s17
      // Predicated region
      $region41: #{tpu_custom_call.1} parent=5 // pred_check
        %p371 = pneg %p370
      $region42: #{tpu_custom_call.1} parent=5 // pred_check_branch
        %373 = sbr.rel (%p371) target = $region44
      $region43: #{tpu_custom_call.1} parent=5 // pred_region
        %s374 = ssub.s32 %s17, 2
        // Predicated region
        $region45: #{tpu_custom_call.1} parent=43 // pred_check
          %p375 = pneg %p116
        $region46: #{tpu_custom_call.1} parent=43 // pred_check_branch
          %377 = sbr.rel (%p375) target = $region48
        $region47: #{tpu_custom_call.1} parent=43 // pred_region
          %s378 = sand.u32 %s101, 1
          %s379 = scalar_lea.sflag [#allocation4], %s378
          %s380 = sand.u32 %s101, 1
          %s381 = smul.addr %s380, 8
          %s382 = scalar_lea.vmem [#allocation7], %s381
          %383 = dma.done %s379, 128
        $region48: #{tpu_custom_call.1} parent=43 // pred_fallthru
          _
      $region44: #{tpu_custom_call.1} parent=5 // pred_fallthru
        _
    $region6: #{tpu_custom_call.1} parent=1 // loop_footer
      %s21 = sadd.s32 1, %s17
    $region7: #{tpu_custom_call.1} parent=1 // loop_footer_branch
      %16 = sbr.rel target = $region3
    $region8: #{tpu_custom_call.1} parent=1 // loop_exit
      _
    %384 = vsyncpa [#allocation3], 1
    %s385 = scalar_lea.sflag [#allocation3], 1
    %386 = vsyncpa %s385, 1
    %387 = vsyncpa [#allocation6], 1
    %s388 = scalar_lea.sflag [#allocation6], 1
    %389 = vsyncpa %s388, 1
    %390 = vsyncpa [#allocation4], 1
    %s391 = scalar_lea.sflag [#allocation4], 1
    %392 = vsyncpa %s391, 1

</llo_original>
